<compile_context>
chip_gen: v5e
topology: v5e:2x2
jax: 0.10.0
libtpu: 0.0.40
codegen_flags: <defaults>
</compile_context>

<pallas_src>
import functools
import math

import jax
import jax.numpy as jnp
from jax import lax
from jax.experimental import pallas as pl
from jax.experimental.pallas import tpu as pltpu


# ---------------------------------------------------------------------------
# Kernel bodies
# ---------------------------------------------------------------------------

def _per_pixel_loss(x, t, *, alpha, gamma, eps, exact_log):
    """x: (B, C, T) f32 logits, t: (B, T) int32 labels -> (B, T) focal loss."""
    C = x.shape[1]

    # numerically stable softmax over the class (sublane) axis
    m = jnp.max(x, axis=1, keepdims=True)            # (B, 1, T)
    e = jnp.exp(x - m)                               # (B, C, T)  EUP
    denom = jnp.sum(e, axis=1, keepdims=True)        # (B, 1, T)  sublane reduce
    recip = pl.reciprocal(denom)                     # one reciprocal per pixel
    p = e * recip + eps                              # input_soft (kornia + eps)

    # one_hot(target) + 1e-6 via a tiny (1, C, 1) iota broadcast
    class_ids = lax.broadcasted_iota(jnp.int32, (1, C, 1), 1)
    oh = (class_ids == t[:, None, :]).astype(jnp.float32) + 1e-6

    one_minus_p = 1.0 - p
    g = float(gamma)
    if g == 2.0:
        w = one_minus_p * one_minus_p                # common case: single vmul
    elif g.is_integer():
        w = lax.integer_pow(one_minus_p, int(g))
    else:
        w = jnp.power(one_minus_p, g)

    if exact_log:
        logp = jnp.log(p)                            # exact kornia log(softmax+eps)
    else:
        # log-softmax: one log per pixel instead of per class (~2x less EUP),
        # semantic delta only when a class probability is <~ eps.
        logp = (x - m) - jnp.log(denom)

    focal = (-alpha) * w * logp
    return jnp.sum(oh * focal, axis=1)               # (B, T)


def _focal_none_kernel(x_ref, t_ref, o_ref, *, alpha, gamma, eps, exact_log):
    # x_ref: (B, C, T) native-dtype logits; t_ref: (B, T) int32; o_ref: (B, T) f32
    x = x_ref[...].astype(jnp.float32)
    t = t_ref[...]
    o_ref[...] = _per_pixel_loss(x, t, alpha=alpha, gamma=gamma, eps=eps,
                                 exact_log=exact_log)
    # Out-of-bounds lanes/rows of the last (partial) blocks are dropped by the
    # Pallas masked writeback, so no explicit mask is needed here.


def _focal_sum_kernel(x_ref, t_ref, o_ref, acc_ref, *, alpha, gamma, eps,
                      exact_log, s_tile, s_valid, nt):
    # acc_ref: (B, s_tile) f32 VMEM scratch, persistent across the spatial grid.
    j = pl.program_id(1)

    @pl.when(j == 0)
    def _init():
        acc_ref[...] = jnp.zeros_like(acc_ref)

    x = x_ref[...].astype(jnp.float32)
    t = t_ref[...]
    loss = _per_pixel_loss(x, t, alpha=alpha, gamma=gamma, eps=eps,
                           exact_log=exact_log)      # (B, s_tile)

    rem = s_valid - (nt - 1) * s_tile                # valid lanes in last tile
    if rem == s_tile:
        # spatial extent divides the tile: never any padding to mask
        acc_ref[...] = acc_ref[...] + loss
    else:
        @pl.when(j < nt - 1)
        def _full():
            acc_ref[...] = acc_ref[...] + loss

        @pl.when(j == nt - 1)
        def _partial():
            lane = lax.broadcasted_iota(jnp.int32, loss.shape, 1)
            acc_ref[...] = acc_ref[...] + jnp.where(lane < rem, loss, 0.0)

    @pl.when(j == nt - 1)
    def _finalize():
        # single cross-lane reduce per batch block, only on the last tile
        o_ref[...] = jnp.sum(acc_ref[...], axis=1, keepdims=True)


# ---------------------------------------------------------------------------
# Wrapper
# ---------------------------------------------------------------------------

def _vmem_config():
    """Per-generation VMEM budget (v5e/v6e: 128 MiB, v7x: 64 MiB physical)."""
    cap = 64 * 1024 * 1024
    try:
        info = pltpu.get_tpu_info()
        cap = int(getattr(info, "vmem_capacity_bytes", 0)) or cap
    except Exception:
        pass
    vmem_limit = min((cap * 3) // 4, 96 * 1024 * 1024)   # scoped limit w/ headroom
    tile_budget = vmem_limit // 2                         # room for temporaries
    return tile_budget, vmem_limit


def _choose_s_tile(S, C, itemsize, b_blk, budget, fused_sum):
    """Largest lane tile (multiple of 128, <= 32768) fitting the VMEM budget."""
    # Per lane of the spatial tile (per grid step):
    #   double-buffered logits block, double-buffered int32 target,
    #   f32 output (or f32 accumulator for the fused-sum path),
    #   plus ~6 f32 (B, C, T) intermediates the compiler keeps in VMEM.
    per_lane = b_blk * (2 * C * itemsize + 2 * 4
                        + (4 if fused_sum else 2 * 4) + 6 * C * 4)
    cap = max(128, min(budget // max(1, per_lane), 32768))
    cap = (cap // 128) * 128
    return S if S <= cap else cap


def focal_loss_pallas(x, target, alpha, gamma=2.0, reduction="none",
                      eps=1e-6, s_tile=None, exact_log=True):
    """Focal loss. x: (N, C, *spatial) float, target: (N, *spatial) int."""
    N, C = x.shape[0], x.shape[1]
    spatial = x.shape[2:]
    S = max(1, math.prod(spatial))

    # Free reshapes only (contiguous); native dtype kept for the logits.
    xf = x.reshape(N, C, S)
    tf = target.reshape(N, S).astype(jnp.int32)
    itemsize = jnp.dtype(xf.dtype).itemsize

    # Batch-row blocking: multiple of 8 (sublane-dense) or the full batch dim.
    b_blk = N if N <= 8 else 8
    nb = pl.cdiv(N, b_blk)

    budget, vmem_limit = _vmem_config()
    fused = reduction in ("mean", "sum")
    if s_tile is None:
        s_tile = _choose_s_tile(S, C, itemsize, b_blk, budget, fused)
    s_tile = int(min(int(s_tile), S))
    if s_tile < S:
        s_tile = max(128, (s_tile // 128) * 128)     # lane-aligned tiles
    nt = pl.cdiv(S, s_tile)

    grid = (nb, nt)
    in_specs = [
        pl.BlockSpec((b_blk, C, s_tile), lambda i, j: (i, 0, j)),
        pl.BlockSpec((b_blk, s_tile), lambda i, j: (i, j)),
    ]

    flops = 12 * N * C * S
    trans = N * C * S * (2 if exact_log else 1) + 2 * N * S
    bytes_in = int(xf.size) * itemsize + int(tf.size) * 4
    cparams = dict(vmem_limit_bytes=int(vmem_limit))

    if reduction == "none":
        kernel = functools.partial(_focal_none_kernel, alpha=float(alpha),
                                   gamma=float(gamma), eps=float(eps),
                                   exact_log=bool(exact_log))
        out = pl.pallas_call(
            kernel,
            out_shape=jax.ShapeDtypeStruct((N, S), jnp.float32),
            grid=grid,
            in_specs=in_specs,
            out_specs=pl.BlockSpec((b_blk, s_tile), lambda i, j: (i, j)),
            compiler_params=pltpu.CompilerParams(
                dimension_semantics=("parallel", "parallel"), **cparams),
            cost_estimate=pl.CostEstimate(
                flops=int(flops), transcendentals=int(trans),
                bytes_accessed=int(bytes_in + N * S * 4)),
        )(xf, tf)
        return out.reshape((N,) + spatial)

    if reduction in ("mean", "sum"):
        kernel = functools.partial(_focal_sum_kernel, alpha=float(alpha),
                                   gamma=float(gamma), eps=float(eps),
                                   exact_log=bool(exact_log),
                                   s_tile=int(s_tile), s_valid=int(S),
                                   nt=int(nt))
        partials = pl.pallas_call(
            kernel,
            out_shape=jax.ShapeDtypeStruct((nb * b_blk, 1), jnp.float32),
            grid=grid,
            in_specs=in_specs,
            out_specs=pl.BlockSpec((b_blk, 1), lambda i, j: (i, 0)),
            scratch_shapes=[pltpu.VMEM((b_blk, s_tile), jnp.float32)],
            compiler_params=pltpu.CompilerParams(
                dimension_semantics=("parallel", "arbitrary"), **cparams),
            cost_estimate=pl.CostEstimate(
                flops=int(flops), transcendentals=int(trans),
                bytes_accessed=int(bytes_in + nb * b_blk * 4)),
        )(xf, tf)
        total = jnp.sum(partials[:N, 0])             # tiny wrapper-side reduce
        if reduction == "sum":
            return total
        return total / jnp.float32(N * S)

    raise NotImplementedError(f"Invalid reduction mode: {reduction}")


class FocalLoss:
    """JAX/Pallas port of the PyTorch FocalLoss module (forward only)."""
    # TODO(synk): backward pass (autograd) is not implemented; forward only.

    def __init__(self, alpha: float, gamma: float = 2.0, reduction: str = "none"):
        self.alpha = alpha
        self.gamma = gamma
        self.reduction = reduction
        self.eps = 1e-6

    def __call__(self, input, target):
        return focal_loss_pallas(input, target, self.alpha, self.gamma,
                                 self.reduction, self.eps)


# ---------------------------------------------------------------------------
# Reference + self-test
# ---------------------------------------------------------------------------

def _reference(x, target, alpha, gamma, eps):
    # Pure-JAX reference mirroring the PyTorch code (reduction='none').
    p = jax.nn.softmax(x.astype(jnp.float32), axis=1) + eps
    C = x.shape[1]
    oh = jax.nn.one_hot(target, C, axis=1, dtype=jnp.float32) + 1e-6
    focal = -alpha * jnp.power(1.0 - p, gamma) * jnp.log(p)
    return jnp.sum(oh * focal, axis=1)


if __name__ == "__main__":
    key = jax.random.PRNGKey(0)
    k1, k2, k3, k4, k5, k6 = jax.random.split(key, 6)

    # Case 1: small single-tile path (S fits one block), none + mean.
    N, C, H, W = 2, 5, 16, 16
    x = jax.random.normal(k1, (N, C, H, W), dtype=jnp.float32)
    target = jax.random.randint(k2, (N, H, W), 0, C, dtype=jnp.int32)
    ref = _reference(x, target, alpha=0.25, gamma=2.0, eps=1e-6)

    out = jax.block_until_ready(
        FocalLoss(alpha=0.25, gamma=2.0, reduction="none")(x, target))
    assert out.shape == (N, H, W)
    assert jnp.allclose(out, ref, rtol=1e-5, atol=1e-6), "none-path mismatch"

    mean_out = jax.block_until_ready(
        FocalLoss(alpha=0.25, gamma=2.0, reduction="mean")(x, target))
    assert jnp.allclose(mean_out, jnp.mean(ref), rtol=1e-5, atol=1e-5), \
        "mean-path mismatch"

    # Optional cheaper log-softmax formulation (not exactly log(softmax+eps)).
    out_ls = jax.block_until_ready(
        focal_loss_pallas(x, target, alpha=0.25, gamma=2.0, reduction="none",
                          exact_log=False))
    assert jnp.allclose(out_ls, ref, rtol=1e-3, atol=2e-3), \
        "log-softmax-path mismatch"

    # Case 2: spatial tiling with a ragged last tile (S=576, tile 256 -> 3
    # tiles, last tile has 64 valid lanes) handled fully in-kernel (no pad).
    N2, C2, H2, W2 = 3, 4, 24, 24
    x2 = jax.random.normal(k3, (N2, C2, H2, W2), dtype=jnp.float32)
    t2 = jax.random.randint(k4, (N2, H2, W2), 0, C2, dtype=jnp.int32)
    ref2 = _reference(x2, t2, alpha=0.5, gamma=2.0, eps=1e-6)

    out2 = jax.block_until_ready(
        focal_loss_pallas(x2, t2, alpha=0.5, gamma=2.0, reduction="none",
                          s_tile=256))
    assert out2.shape == (N2, H2, W2)
    assert jnp.allclose(out2, ref2, rtol=1e-5, atol=1e-6), "tiled-none mismatch"

    sum2 = jax.block_until_ready(
        focal_loss_pallas(x2, t2, alpha=0.5, gamma=2.0, reduction="sum",
                          s_tile=256))
    assert jnp.allclose(sum2, jnp.sum(ref2), rtol=1e-5, atol=1e-5), \
        "tiled-sum mismatch"

    # Case 3: bf16 logits stay bf16 in HBM (cast to f32 in VMEM).
    N3, C3, H3, W3 = 2, 8, 32, 32
    x3 = jax.random.normal(k5, (N3, C3, H3, W3), dtype=jnp.bfloat16)
    t3 = jax.random.randint(k6, (N3, H3, W3), 0, C3, dtype=jnp.int32)
    ref3 = _reference(x3, t3, alpha=0.25, gamma=2.0, eps=1e-6)
    out3 = jax.block_until_ready(
        focal_loss_pallas(x3, t3, alpha=0.25, gamma=2.0, reduction="none"))
    assert jnp.allclose(out3, ref3, rtol=1e-5, atol=1e-5), "bf16-path mismatch"

    print("KERNEL_OK")
</pallas_src>

<mosaic_0001>
module attributes {stable_mosaic.version = 11 : i64} {
  func.func @_focal_none_kernel(%arg0: i32, %arg1: i32, %arg2: memref<2x5x256xf32, #tpu.memory_space<vmem>>, %arg3: memref<2x256xi32, #tpu.memory_space<vmem>>, %arg4: memref<2x256xf32, #tpu.memory_space<vmem>>) attributes {dimension_semantics = [#tpu.dimension_semantics<parallel>, #tpu.dimension_semantics<parallel>], iteration_bounds = array<i64: 1, 1>, scalar_prefetch = 0 : i64, scratch_operands = 0 : i64, tpu.core_type = #tpu.core_type<tc>, window_params = [{transform_indices = @transform_0, window_bounds = array<i64: 2, 5, 256>}, {transform_indices = @transform_1, window_bounds = array<i64: 2, 256>}, {transform_indices = @transform_2, window_bounds = array<i64: 2, 256>}]} {
    %c0 = arith.constant 0 : index
    %c0_0 = arith.constant 0 : index
    %c0_1 = arith.constant 0 : index
    %0 = vector.load %arg2[%c0, %c0_0, %c0_1] : memref<2x5x256xf32, #tpu.memory_space<vmem>>, vector<2x5x256xf32>
    %c0_2 = arith.constant 0 : index
    %c0_3 = arith.constant 0 : index
    %1 = vector.load %arg3[%c0_2, %c0_3] : memref<2x256xi32, #tpu.memory_space<vmem>>, vector<2x256xi32>
    %cst = arith.constant dense<0xFF800000> : vector<2x256xf32>
    %2 = vector.multi_reduction <maximumf>, %0, %cst [1] : vector<2x5x256xf32> to vector<2x256xf32>
    %3 = vector.shape_cast %2 : vector<2x256xf32> to vector<2x1x256xf32>
    %4 = vector.broadcast %3 : vector<2x1x256xf32> to vector<2x5x256xf32>
    %5 = arith.subf %0, %4 : vector<2x5x256xf32>
    %6 = math.exp %5 : vector<2x5x256xf32>
    %cst_4 = arith.constant dense<0.000000e+00> : vector<2x256xf32>
    %7 = vector.multi_reduction <add>, %6, %cst_4 [1] : vector<2x5x256xf32> to vector<2x256xf32>
    %8 = vector.shape_cast %7 : vector<2x256xf32> to vector<2x1x256xf32>
    %9 = tpu.reciprocal %8 : vector<2x1x256xf32> -> vector<2x1x256xf32>
    %10 = vector.broadcast %9 : vector<2x1x256xf32> to vector<2x5x256xf32>
    %11 = arith.mulf %6, %10 : vector<2x5x256xf32>
    %cst_5 = arith.constant 9.99999997E-7 : f32
    %12 = vector.broadcast %cst_5 : f32 to vector<2x5x256xf32>
    %13 = arith.addf %11, %12 : vector<2x5x256xf32>
    %14 = tpu.iota {dimensions = array<i32: 1>} : vector<1x5x1xi32>
    %15 = vector.shape_cast %1 : vector<2x256xi32> to vector<2x1x256xi32>
    %16 = vector.broadcast %14 : vector<1x5x1xi32> to vector<2x5x256xi32>
    %17 = vector.broadcast %15 : vector<2x1x256xi32> to vector<2x5x256xi32>
    %18 = arith.cmpi eq, %16, %17 : vector<2x5x256xi32>
    %19 = arith.extui %18 : vector<2x5x256xi1> to vector<2x5x256xi32>
    %20 = arith.sitofp %19 : vector<2x5x256xi32> to vector<2x5x256xf32>
    %cst_6 = arith.constant 9.99999997E-7 : f32
    %21 = vector.broadcast %cst_6 : f32 to vector<2x5x256xf32>
    %22 = arith.addf %20, %21 : vector<2x5x256xf32>
    %cst_7 = arith.constant 1.000000e+00 : f32
    %23 = vector.broadcast %cst_7 : f32 to vector<2x5x256xf32>
    %24 = arith.subf %23, %13 : vector<2x5x256xf32>
    %25 = arith.mulf %24, %24 : vector<2x5x256xf32>
    %26 = math.log %13 : vector<2x5x256xf32>
    %cst_8 = arith.constant -2.500000e-01 : f32
    %27 = vector.broadcast %cst_8 : f32 to vector<2x5x256xf32>
    %28 = arith.mulf %27, %25 : vector<2x5x256xf32>
    %29 = arith.mulf %28, %26 : vector<2x5x256xf32>
    %30 = arith.mulf %22, %29 : vector<2x5x256xf32>
    %cst_9 = arith.constant dense<0.000000e+00> : vector<2x256xf32>
    %31 = vector.multi_reduction <add>, %30, %cst_9 [1] : vector<2x5x256xf32> to vector<2x256xf32>
    %c0_10 = arith.constant 0 : index
    %c0_11 = arith.constant 0 : index
    %32 = vector.load %arg4[%c0_10, %c0_11] : memref<2x256xf32, #tpu.memory_space<vmem>>, vector<2x256xf32>
    tpu.vector_store %arg4[%c0_10, %c0_11], %31 {strides = array<i32>} : memref<2x256xf32, #tpu.memory_space<vmem>>, vector<2x256xf32>,
    return
  }
  func.func @transform_0(%arg0: i32, %arg1: i32) -> (i32, i32, i32) {
    %c0_i32 = arith.constant 0 : i32
    %c0_i32_0 = arith.constant 0 : i32
    return %arg0, %c0_i32, %arg1 : i32, i32, i32
  }
  func.func @transform_1(%arg0: i32, %arg1: i32) -> (i32, i32) {
    %c0_i32 = arith.constant 0 : i32
    return %arg0, %arg1 : i32, i32
  }
  func.func @transform_2(%arg0: i32, %arg1: i32) -> (i32, i32) {
    %c0_i32 = arith.constant 0 : i32
    return %arg0, %arg1 : i32, i32
  }
}

</mosaic_0001>

<llo_original>
// kernel: tpu_custom_call.1
$region0: #{tpu_custom_call.1}
  #allocation0 [shape = 'u32[]', space=smem, size = 0x4, offset = 0x4, fixed_abs, tag = 'smem constant byte address 0x4 - core index']
  #allocation1 [shape = 'u32[72,128]{1,0:T(1,128)}', space=vmem, size = 0x9000, scoped, tag = 'internal scratch']
  %s0 = inlined_call_operand.vmem [shape: f32[2,5,256], index: 0, kind: input, shape index: {}]
  %s1 = inlined_call_operand.vmem [shape: s32[2,256], index: 1, kind: input, shape index: {}]
  %s2 = inlined_call_operand.hbm [shape: f32[2,256], index: 2, kind: output, shape index: {}]
  %s3 = sld [smem:[#allocation0]]
  $region18: #{tpu_custom_call.1} parent=0
    _
  %s5 = ssub.s32 1, %s3
  %s6 = scalar_select 0, %s5, %s3
  $region1: #{tpu_custom_call.1} parent=0
    #allocation2 [shape = 'u8[2048]{0}', space=vmem, size = 0x800, scoped, tag = 'output window, operand 0, single buffered']
    #allocation3 [shape = 's32[1]{0}', space=sflag, size = 0x4, scoped, tag = 'scoped memory for tpu_custom_call.1']
    %7 = vsyncpa [#allocation3], 0
    // Predicated region
    $region2: #{tpu_custom_call.1} parent=1 // pred_check
      _
    $region3: #{tpu_custom_call.1} parent=1 // pred_check_branch
      %9 = sbr.rel (0) target = $region5
    $region4: #{tpu_custom_call.1} parent=1 // pred_region
      _
    $region5: #{tpu_custom_call.1} parent=1 // pred_fallthru
      _
    // Predicated region
    $region6: #{tpu_custom_call.1} parent=1 // pred_check
      _
    $region7: #{tpu_custom_call.1} parent=1 // pred_check_branch
      %11 = sbr.rel (0) target = $region9
    $region8: #{tpu_custom_call.1} parent=1 // pred_region
      _
    $region9: #{tpu_custom_call.1} parent=1 // pred_fallthru
      _
    %v12 = vld [vmem:[%s0] sm:$0x1f]
    %v13 = vld [vmem:[%s0 + $0x8] sm:$0x1f]
    %v14 = vld [vmem:[%s0 + $0x10] sm:$0x1f]
    %v15 = vld [vmem:[%s0 + $0x18] sm:$0x1f]
    %v16 = vld [vmem:[%s1] sm:$0xf]
    %vm17 = vcmask 1044480
    %v18 = vsel %vm17, %v12, -inf
    %v19 = vrot.slane %v18, 4
    %v20 = vmax.f32 %v18, %v19
    %v21 = vrot.slane %v20, 2
    %v22 = vmax.f32 %v20, %v21
    %v23 = vrot.slane %v22, 1
    %v24 = vmax.f32 %v22, %v23
    %v25 = vsel %vm17, %v13, -inf
    %v26 = vrot.slane %v25, 4
    %v27 = vmax.f32 %v25, %v26
    %v28 = vrot.slane %v27, 2
    %v29 = vmax.f32 %v27, %v28
    %v30 = vrot.slane %v29, 1
    %v31 = vmax.f32 %v29, %v30
    %v32 = vsel %vm17, %v14, -inf
    %v33 = vrot.slane %v32, 4
    %v34 = vmax.f32 %v32, %v33
    %v35 = vrot.slane %v34, 2
    %v36 = vmax.f32 %v34, %v35
    %v37 = vrot.slane %v36, 1
    %v38 = vmax.f32 %v36, %v37
    %v39 = vsel %vm17, %v15, -inf
    %v40 = vrot.slane %v39, 4
    %v41 = vmax.f32 %v39, %v40
    %v42 = vrot.slane %v41, 2
    %v43 = vmax.f32 %v41, %v42
    %v44 = vrot.slane %v43, 1
    %v45 = vmax.f32 %v43, %v44
    %v46 = vsub.f32 %v12, %v24
    %v47 = vsub.f32 %v13, %v31
    %v48 = vsub.f32 %v14, %v38
    %v49 = vsub.f32 %v15, %v45
    %v50 = vmul.f32 %v46, 1.442695
    %v51 = vpow.pop %v50
    %v52 = vmul.f32 %v47, 1.442695
    %v53 = vpow.pop %v52
    %v54 = vmul.f32 %v48, 1.442695
    %v55 = vpow.pop %v54
    %v56 = vmul.f32 %v49, 1.442695
    %v57 = vpow.pop %v56
    %v58 = vsel %vm17, %v51, 0.0
    %v59 = vrot.slane %v58, 4
    %v60 = vadd.f32 %v58, %v59
    %v61 = vrot.slane %v60, 2
    %v62 = vadd.f32 %v60, %v61
    %v63 = vrot.slane %v62, 1
    %v64 = vadd.f32 %v62, %v63
    %v65 = vsel %vm17, %v53, 0.0
    %v66 = vrot.slane %v65, 4
    %v67 = vadd.f32 %v65, %v66
    %v68 = vrot.slane %v67, 2
    %v69 = vadd.f32 %v67, %v68
    %v70 = vrot.slane %v69, 1
    %v71 = vadd.f32 %v69, %v70
    %v72 = vsel %vm17, %v55, 0.0
    %v73 = vrot.slane %v72, 4
    %v74 = vadd.f32 %v72, %v73
    %v75 = vrot.slane %v74, 2
    %v76 = vadd.f32 %v74, %v75
    %v77 = vrot.slane %v76, 1
    %v78 = vadd.f32 %v76, %v77
    %v79 = vsel %vm17, %v57, 0.0
    %v80 = vrot.slane %v79, 4
    %v81 = vadd.f32 %v79, %v80
    %v82 = vrot.slane %v81, 2
    %v83 = vadd.f32 %v81, %v82
    %v84 = vrot.slane %v83, 1
    %v85 = vadd.f32 %v83, %v84
    %v86 = vrcp.pop %v64
    %v87 = vmul.f32 %v64, %v86
    %v88 = vsub.f32 1.0, %v87
    %v89 = vmul.f32 %v86, %v88
    %v90 = vadd.f32 %v86, %v89
    %vm91 = vweird.f32 %v64
    %vm92 = vweird.f32 %v86
    %vm93 = vmor %vm91, %vm92
    %v94 = vsel %vm93, %v86, %v90
    %v95 = vand.u32 2147483647, %v64
    %vm96 = vcmp.eq.f32.partialorder %v95, 8.507059e+37
    %v97 = vand.u32 %v64, 2147483648
    %v98 = vor.u32 1.1754944e-38, %v97
    %v99 = vsel %vm96, %v98, %v94
    %v100 = vrcp.pop %v71
    %v101 = vmul.f32 %v71, %v100
    %v102 = vsub.f32 1.0, %v101
    %v103 = vmul.f32 %v100, %v102
    %v104 = vadd.f32 %v100, %v103
    %vm105 = vweird.f32 %v71
    %vm106 = vweird.f32 %v100
    %vm107 = vmor %vm105, %vm106
    %v108 = vsel %vm107, %v100, %v104
    %v109 = vand.u32 2147483647, %v71
    %vm110 = vcmp.eq.f32.partialorder %v109, 8.507059e+37
    %v111 = vand.u32 %v71, 2147483648
    %v112 = vor.u32 1.1754944e-38, %v111
    %v113 = vsel %vm110, %v112, %v108
    %v114 = vrcp.pop %v78
    %v115 = vmul.f32 %v78, %v114
    %v116 = vsub.f32 1.0, %v115
    %v117 = vmul.f32 %v114, %v116
    %v118 = vadd.f32 %v114, %v117
    %vm119 = vweird.f32 %v78
    %vm120 = vweird.f32 %v114
    %vm121 = vmor %vm119, %vm120
    %v122 = vsel %vm121, %v114, %v118
    %v123 = vand.u32 2147483647, %v78
    %vm124 = vcmp.eq.f32.partialorder %v123, 8.507059e+37
    %v125 = vand.u32 %v78, 2147483648
    %v126 = vor.u32 1.1754944e-38, %v125
    %v127 = vsel %vm124, %v126, %v122
    %v128 = vrcp.pop %v85
    %v129 = vmul.f32 %v85, %v128
    %v130 = vsub.f32 1.0, %v129
    %v131 = vmul.f32 %v128, %v130
    %v132 = vadd.f32 %v128, %v131
    %vm133 = vweird.f32 %v85
    %vm134 = vweird.f32 %v128
    %vm135 = vmor %vm133, %vm134
    %v136 = vsel %vm135, %v128, %v132
    %v137 = vand.u32 2147483647, %v85
    %vm138 = vcmp.eq.f32.partialorder %v137, 8.507059e+37
    %v139 = vand.u32 %v85, 2147483648
    %v140 = vor.u32 1.1754944e-38, %v139
    %v141 = vsel %vm138, %v140, %v136
    %v142 = vmul.f32 %v51, %v99
    %v143 = vmul.f32 %v53, %v113
    %v144 = vmul.f32 %v55, %v127
    %v145 = vmul.f32 %v57, %v141
    %v146 = vadd.f32 %v142, 1e-06
    %v147 = vadd.f32 %v143, 1e-06
    %v148 = vadd.f32 %v144, 1e-06
    %v149 = vadd.f32 %v145, 1e-06
    %v150 = vlaneseq
    %v151 = vshrl.u32 %v150, 7
    %v152 = vrot.slane %v16, 1
    %v153 = vrot.slane %v16, 2
    %v154 = vrot.slane %v16, 3
    %vm155 = vcmask 1040384
    %v156 = vsel %vm155, %v16, %v152
    %vm157 = vcmask 1042434
    %v158 = vsel %vm157, %v153, %v154
    %vm159 = vcmask 1041408
    %v160 = vsel %vm159, %v156, %v158
    %vm161 = vcmask 1041409
    %v162 = vsel %vm161, %v16, %v152
    %vm163 = vcmask 1043459
    %v164 = vsel %vm163, %v153, %v154
    %vm165 = vcmask 1042433
    %v166 = vsel %vm165, %v162, %v164
    %v167 = vrot.slane %v166, 1
    %v168 = vperm.slane %v160, 0
    %v169 = vperm.slane %v160, 1
    %v170 = vperm.slane %v167, 0
    %v171 = vperm.slane %v167, 1
    %vm172 = vcmp.eq.s32.totalorder %v151, %v168
    %vm173 = vcmp.eq.s32.totalorder %v151, %v169
    %vm174 = vcmp.eq.s32.totalorder %v151, %v170
    %vm175 = vcmp.eq.s32.totalorder %v151, %v171
    %v176 = vsel %vm172, 1, 0
    %v177 = vsel %vm173, 1, 0
    %v178 = vsel %vm174, 1, 0
    %v179 = vsel %vm175, 1, 0
    %v180 = vcvt.s32.f32 %v176
    %v181 = vcvt.s32.f32 %v177
    %v182 = vcvt.s32.f32 %v178
    %v183 = vcvt.s32.f32 %v179
    %v184 = vadd.f32 %v180, 1e-06
    %v185 = vadd.f32 %v181, 1e-06
    %v186 = vadd.f32 %v182, 1e-06
    %v187 = vadd.f32 %v183, 1e-06
    %v188 = vsub.f32 1.0, %v146
    %v189 = vsub.f32 1.0, %v147
    %v190 = vsub.f32 1.0, %v148
    %v191 = vsub.f32 1.0, %v149
    %v192 = vmul.f32 %v188, %v188
    %v193 = vmul.f32 %v189, %v189
    %v194 = vmul.f32 %v190, %v190
    %v195 = vmul.f32 %v191, %v191
    %v196 = vlog2.pop %v146
    %v197 = vmul.f32 %v196, 0.6931472
    %v198 = vlog2.pop %v147
    %v199 = vmul.f32 %v198, 0.6931472
    %v200 = vlog2.pop %v148
    %v201 = vmul.f32 %v200, 0.6931472
    %v202 = vlog2.pop %v149
    %v203 = vmul.f32 %v202, 0.6931472
    %v204 = vmul.f32 %v192, -0.25
    %v205 = vmul.f32 %v193, -0.25
    %v206 = vmul.f32 %v194, -0.25
    %v207 = vmul.f32 %v195, -0.25
    %v208 = vmul.f32 %v204, %v197
    %v209 = vmul.f32 %v205, %v199
    %v210 = vmul.f32 %v206, %v201
    %v211 = vmul.f32 %v207, %v203
    %v212 = vmul.f32 %v184, %v208
    %v213 = vmul.f32 %v185, %v209
    %v214 = vmul.f32 %v186, %v210
    %v215 = vmul.f32 %v187, %v211
    %v216 = vsel %vm17, %v212, 0.0
    %v217 = vrot.slane %v216, 4
    %v218 = vadd.f32 %v216, %v217
    %v219 = vrot.slane %v218, 2
    %v220 = vadd.f32 %v218, %v219
    %v221 = vrot.slane %v220, 1
    %v222 = vadd.f32 %v220, %v221
    %v223 = vsel %vm17, %v213, 0.0
    %v224 = vrot.slane %v223, 4
    %v225 = vadd.f32 %v223, %v224
    %v226 = vrot.slane %v225, 2
    %v227 = vadd.f32 %v225, %v226
    %v228 = vrot.slane %v227, 1
    %v229 = vadd.f32 %v227, %v228
    %v230 = vsel %vm17, %v214, 0.0
    %v231 = vrot.slane %v230, 4
    %v232 = vadd.f32 %v230, %v231
    %v233 = vrot.slane %v232, 2
    %v234 = vadd.f32 %v232, %v233
    %v235 = vrot.slane %v234, 1
    %v236 = vadd.f32 %v234, %v235
    %v237 = vsel %vm17, %v215, 0.0
    %v238 = vrot.slane %v237, 4
    %v239 = vadd.f32 %v237, %v238
    %v240 = vrot.slane %v239, 2
    %v241 = vadd.f32 %v239, %v240
    %v242 = vrot.slane %v241, 1
    %v243 = vadd.f32 %v241, %v242
    %v248 = vrot.slane %v229, 6
    %v249 = vrot.slane %v243, 6
    %v250 = vsel %vm159, %v222, %v248
    %v251 = vsel %vm159, %v236, %v249
    %vm252 = vcmask 1044484
    %v253 = vsel %vm252, %v250, %v250
    %vm254 = vcmask 1046534
    %v255 = vsel %vm254, %v250, %v253
    %v256 = vrot.slane %v251, 7
    %v257 = vsel %vm161, %v256, %v255
    %v258 = vsel %vm163, %v256, %v257
    %vm259 = vcmask 1045509
    %v260 = vsel %vm259, %v256, %v258
    %vm261 = vcmask 1047559
    %v262 = vsel %vm261, %v256, %v260
    %264 = vst [vmem:[#allocation2] sm:$0xf] %v262
    // Predicated region
    $region10: #{tpu_custom_call.1} parent=1 // pred_check
      _
    $region11: #{tpu_custom_call.1} parent=1 // pred_check_branch
      %266 = sbr.rel (0) target = $region13
    $region12: #{tpu_custom_call.1} parent=1 // pred_region
      %268 = vsyncadd [#allocation3], 0
      %s270 = sshll.u32 [#allocation2], 4
      %s271 = int_to_ptr.vmem [resolvable:$true] %s270
      %s272 = sshll.u32 %s2, 4
      %s273 = int_to_ptr.hbm [resolvable:$true] %s272
      %275 = dma.vmem_to_hbm [thread:$0]  %s271, 64, %s273, [#allocation3]
    $region13: #{tpu_custom_call.1} parent=1 // pred_fallthru
      _
    // Predicated region
    $region14: #{tpu_custom_call.1} parent=1 // pred_check
      _
    $region15: #{tpu_custom_call.1} parent=1 // pred_check_branch
      %277 = sbr.rel (0) target = $region17
    $region16: #{tpu_custom_call.1} parent=1 // pred_region
      %279 = dma.done [#allocation3], 64
    $region17: #{tpu_custom_call.1} parent=1 // pred_fallthru
      _
    %280 = vsyncpa [#allocation3], 1

</llo_original>
